<compile_context>
chip_gen: v6e
topology: v6e:2x2x1
jax: 0.10.0
libtpu: 0.0.40
codegen_flags: <defaults>
</compile_context>

<pallas_src>
import jax
import jax.numpy as jnp
from jax.experimental import pallas as pl
from jax.experimental.pallas import tpu as pltpu

_LANE = 128
_DEFAULT_TILE_ROWS = 1024  # (1024,128) f32 block = 512 KiB/input/buffer


def _round_up(x: int, m: int) -> int:
    return ((x + m - 1) // m) * m


def _make_tversky_kernel(smooth: float, alpha: float):
    def kernel(x_ref, m_ref, loss_ref, acc_ref):
        # x_ref / m_ref: (1, TILE_ROWS, 128) blocks in the input dtype.
        # loss_ref:      (1, 1, 128) per-batch output block (resident across chunks).
        # acc_ref:       (3, 8, 128) f32 lane-wise accumulators [tp, sum_p, sum_m].
        c = pl.program_id(1)

        @pl.when(c == 0)
        def _init():
            acc_ref[...] = jnp.zeros_like(acc_ref)

        x = x_ref[0].astype(jnp.float32)          # (TILE_ROWS, 128)
        m = m_ref[0].astype(jnp.float32)
        p = jax.nn.sigmoid(x)                     # EUP

        tr, lane = x.shape
        k = tr // 8
        # Reshape keeps the native (8,128) vreg tiling, so the axis-0 sums are
        # pure VALU vreg adds (no XLU reduction on the hot path) and only 3
        # vreg stores per grid step.
        acc_ref[0] += jnp.sum((p * m).reshape(k, 8, lane), axis=0)
        acc_ref[1] += jnp.sum(p.reshape(k, 8, lane), axis=0)
        acc_ref[2] += jnp.sum(m.reshape(k, 8, lane), axis=0)

        @pl.when(c == pl.num_programs(1) - 1)
        def _finalize():
            tp = jnp.sum(acc_ref[0])              # single cross-lane reduce / batch
            sp = jnp.sum(acc_ref[1])
            sm = jnp.sum(acc_ref[2])
            fp = sp - tp                          # sum(p * (1 - m))
            fn = sm - tp                          # sum((1 - p) * m)
            tversky = (tp + smooth) / (
                tp + alpha * fp + (1.0 - alpha) * fn + smooth
            )
            # Broadcast across the lane-dense output block (written once).
            loss_ref[...] = (1.0 - tversky) + jnp.zeros_like(loss_ref)

    return kernel


def focal_tversky_loss(logits, mask, *, smooth=1.0, alpha=0.7, gamma=0.75,
                       tile_rows=_DEFAULT_TILE_ROWS):
    """Equivalent of FocalTverskyLoss(smooth, alpha, gamma, reduction='avg')."""
    batch = logits.shape[0]
    logits2 = logits.reshape(batch, -1)           # keep native dtype (bf16 OK)
    mask2 = mask.reshape(batch, -1)
    n = logits2.shape[1]

    rows = -(-n // _LANE)                         # cdiv(n, 128)
    t_rows = min(int(tile_rows), _round_up(max(rows, 1), 8))
    rows_p = _round_up(rows, t_rows)
    pad = rows_p * _LANE - n
    if pad:
        # Padded logits -> sigmoid == 0 exactly; padded mask == 0, so padding
        # contributes nothing to tp / sum(pred) / sum(mask).
        logits2 = jnp.pad(logits2, ((0, 0), (0, pad)), constant_values=-1e4)
        mask2 = jnp.pad(mask2, ((0, 0), (0, pad)), constant_values=0)
    logits3 = logits2.reshape(batch, rows_p, _LANE)
    mask3 = mask2.reshape(batch, rows_p, _LANE)
    n_chunks = rows_p // t_rows

    kernel = _make_tversky_kernel(float(smooth), float(alpha))

    per_batch = pl.pallas_call(
        kernel,
        out_shape=jax.ShapeDtypeStruct((batch, 1, _LANE), jnp.float32),
        grid=(batch, n_chunks),
        in_specs=[
            pl.BlockSpec((1, t_rows, _LANE), lambda b, c: (b, c, 0)),
            pl.BlockSpec((1, t_rows, _LANE), lambda b, c: (b, c, 0)),
        ],
        out_specs=pl.BlockSpec((1, 1, _LANE), lambda b, c: (b, 0, 0)),
        scratch_shapes=[pltpu.VMEM((3, 8, _LANE), jnp.float32)],
        compiler_params=pltpu.CompilerParams(
            dimension_semantics=("parallel", "arbitrary")),
    )(logits3, mask3)

    loss = per_batch[:, 0, 0]                     # (B,) per-batch Tversky loss
    # 'avg' reduction over B scalars + focal power: trivial, done in plain JAX
    # so the batch grid axis can remain 'parallel' across TensorCores.
    return jnp.mean(loss) ** gamma


def _reference_focal_tversky(logits, mask, smooth=1.0, alpha=0.7, gamma=0.75):
    # Pure-JAX reference mirroring the PyTorch module, for sanity checking.
    b = logits.shape[0]
    pred = jax.nn.sigmoid(logits.reshape(b, -1).astype(jnp.float32))
    m = mask.reshape(b, -1).astype(jnp.float32)
    tp = (pred * m).sum(1)
    fp = (pred * (1 - m)).sum(1)
    fn = ((1 - pred) * m).sum(1)
    loss = 1 - (tp + smooth) / (tp + alpha * fp + (1 - alpha) * fn + smooth)
    return loss.mean() ** gamma


if __name__ == "__main__":
    key = jax.random.PRNGKey(0)
    k1, k2, k3, k4 = jax.random.split(key, 4)

    # Case 1: f32, lane-aligned shapes (like the PyTorch default path).
    B, C, H, W = 2, 4, 16, 16
    logits = jax.random.normal(k1, (B, C, H, W), dtype=jnp.float32)
    mask = jax.random.bernoulli(k2, p=0.3, shape=(B, C, H, W)).astype(jnp.float32)

    out = focal_tversky_loss(logits, mask)
    out = jax.block_until_ready(out)
    ref = _reference_focal_tversky(logits, mask)
    assert jnp.allclose(out, ref, atol=1e-5, rtol=1e-5), (out, ref)

    # Case 2: bf16 inputs, unaligned N (exercises padding + native-width ingest).
    B2, C2, H2, W2 = 2, 3, 17, 13
    logits_b = jax.random.normal(k3, (B2, C2, H2, W2)).astype(jnp.bfloat16)
    mask_b = jax.random.bernoulli(k4, p=0.4, shape=(B2, C2, H2, W2)).astype(jnp.bfloat16)

    out_b = focal_tversky_loss(logits_b, mask_b)
    out_b = jax.block_until_ready(out_b)
    ref_b = _reference_focal_tversky(logits_b, mask_b)
    assert jnp.allclose(out_b, ref_b, atol=1e-5, rtol=1e-5), (out_b, ref_b)

    print("KERNEL_OK")
</pallas_src>

<mosaic_0001>
module attributes {stable_mosaic.version = 11 : i64} {
  func.func @kernel(%arg0: i32, %arg1: i32, %arg2: memref<1x8x128xf32, #tpu.memory_space<vmem>>, %arg3: memref<1x8x128xf32, #tpu.memory_space<vmem>>, %arg4: memref<1x1x128xf32, #tpu.memory_space<vmem>>, %arg5: memref<3x8x128xf32, #tpu.memory_space<vmem>>) attributes {dimension_semantics = [#tpu.dimension_semantics<parallel>, #tpu.dimension_semantics<arbitrary>], iteration_bounds = array<i64: 2, 1>, scalar_prefetch = 0 : i64, scratch_operands = 1 : i64, tpu.core_type = #tpu.core_type<tc>, window_params = [{transform_indices = @transform_0, window_bounds = array<i64: 1, 8, 128>}, {transform_indices = @transform_1, window_bounds = array<i64: 1, 8, 128>}, {transform_indices = @transform_2, window_bounds = array<i64: 1, 1, 128>}]} {
    %c0_i32 = arith.constant 0 : i32
    %0 = arith.cmpi eq, %arg1, %c0_i32 : i32
    %1 = arith.extui %0 : i1 to i32
    %c0_i32_0 = arith.constant 0 : i32
    %2 = arith.cmpi ne, %1, %c0_i32_0 : i32
    scf.if %2 {
      %cst_27 = arith.constant 0.000000e+00 : f32
      %40 = vector.broadcast %cst_27 : f32 to vector<3x8x128xf32>
      %c0_28 = arith.constant 0 : index
      %c0_29 = arith.constant 0 : index
      %c0_30 = arith.constant 0 : index
      %41 = vector.load %arg5[%c0_28, %c0_29, %c0_30] : memref<3x8x128xf32, #tpu.memory_space<vmem>>, vector<3x8x128xf32>
      tpu.vector_store %arg5[%c0_28, %c0_29, %c0_30], %40 {strides = array<i32>} : memref<3x8x128xf32, #tpu.memory_space<vmem>>, vector<3x8x128xf32>,
    } else {
    }
    %c0 = arith.constant 0 : index
    %c0_1 = arith.constant 0 : index
    %c0_2 = arith.constant 0 : index
    %3 = vector.load %arg2[%c0, %c0_1, %c0_2] : memref<1x8x128xf32, #tpu.memory_space<vmem>>, vector<1x8x128xf32>
    %4 = vector.shape_cast %3 : vector<1x8x128xf32> to vector<8x128xf32>
    %c0_3 = arith.constant 0 : index
    %c0_4 = arith.constant 0 : index
    %c0_5 = arith.constant 0 : index
    %5 = vector.load %arg3[%c0_3, %c0_4, %c0_5] : memref<1x8x128xf32, #tpu.memory_space<vmem>>, vector<1x8x128xf32>
    %6 = vector.shape_cast %5 : vector<1x8x128xf32> to vector<8x128xf32>
    %7 = arith.negf %4 : vector<8x128xf32>
    %8 = math.exp %7 : vector<8x128xf32>
    %cst = arith.constant 1.000000e+00 : f32
    %9 = vector.broadcast %cst : f32 to vector<8x128xf32>
    %10 = arith.addf %9, %8 : vector<8x128xf32>
    %11 = arith.divf %9, %10 : vector<8x128xf32>
    %c0_6 = arith.constant 0 : index
    %c0_7 = arith.constant 0 : index
    %c0_8 = arith.constant 0 : index
    %12 = vector.load %arg5[%c0_6, %c0_7, %c0_8] : memref<3x8x128xf32, #tpu.memory_space<vmem>>, vector<1x8x128xf32>
    %13 = vector.shape_cast %12 : vector<1x8x128xf32> to vector<8x128xf32>
    %14 = arith.mulf %11, %6 : vector<8x128xf32>
    %15 = vector.shape_cast %14 : vector<8x128xf32> to vector<1x8x128xf32>
    %cst_9 = arith.constant dense<0.000000e+00> : vector<8x128xf32>
    %16 = vector.multi_reduction <add>, %15, %cst_9 [0] : vector<1x8x128xf32> to vector<8x128xf32>
    %17 = arith.addf %13, %16 : vector<8x128xf32>
    %c0_10 = arith.constant 0 : index
    %c0_11 = arith.constant 0 : index
    %c0_12 = arith.constant 0 : index
    %18 = vector.load %arg5[%c0_10, %c0_11, %c0_12] : memref<3x8x128xf32, #tpu.memory_space<vmem>>, vector<1x8x128xf32>
    %19 = vector.shape_cast %18 : vector<1x8x128xf32> to vector<8x128xf32>
    %20 = vector.shape_cast %17 : vector<8x128xf32> to vector<1x8x128xf32>
    tpu.vector_store %arg5[%c0_10, %c0_11, %c0_12], %20 {strides = array<i32>} : memref<3x8x128xf32, #tpu.memory_space<vmem>>, vector<1x8x128xf32>,
    %c1 = arith.constant 1 : index
    %c0_13 = arith.constant 0 : index
    %c0_14 = arith.constant 0 : index
    %21 = vector.load %arg5[%c1, %c0_13, %c0_14] : memref<3x8x128xf32, #tpu.memory_space<vmem>>, vector<1x8x128xf32>
    %22 = vector.shape_cast %21 : vector<1x8x128xf32> to vector<8x128xf32>
    %23 = vector.shape_cast %11 : vector<8x128xf32> to vector<1x8x128xf32>
    %cst_15 = arith.constant dense<0.000000e+00> : vector<8x128xf32>
    %24 = vector.multi_reduction <add>, %23, %cst_15 [0] : vector<1x8x128xf32> to vector<8x128xf32>
    %25 = arith.addf %22, %24 : vector<8x128xf32>
    %c1_16 = arith.constant 1 : index
    %c0_17 = arith.constant 0 : index
    %c0_18 = arith.constant 0 : index
    %26 = vector.load %arg5[%c1_16, %c0_17, %c0_18] : memref<3x8x128xf32, #tpu.memory_space<vmem>>, vector<1x8x128xf32>
    %27 = vector.shape_cast %26 : vector<1x8x128xf32> to vector<8x128xf32>
    %28 = vector.shape_cast %25 : vector<8x128xf32> to vector<1x8x128xf32>
    tpu.vector_store %arg5[%c1_16, %c0_17, %c0_18], %28 {strides = array<i32>} : memref<3x8x128xf32, #tpu.memory_space<vmem>>, vector<1x8x128xf32>,
    %c2 = arith.constant 2 : index
    %c0_19 = arith.constant 0 : index
    %c0_20 = arith.constant 0 : index
    %29 = vector.load %arg5[%c2, %c0_19, %c0_20] : memref<3x8x128xf32, #tpu.memory_space<vmem>>, vector<1x8x128xf32>
    %30 = vector.shape_cast %29 : vector<1x8x128xf32> to vector<8x128xf32>
    %31 = vector.shape_cast %6 : vector<8x128xf32> to vector<1x8x128xf32>
    %cst_21 = arith.constant dense<0.000000e+00> : vector<8x128xf32>
    %32 = vector.multi_reduction <add>, %31, %cst_21 [0] : vector<1x8x128xf32> to vector<8x128xf32>
    %33 = arith.addf %30, %32 : vector<8x128xf32>
    %c2_22 = arith.constant 2 : index
    %c0_23 = arith.constant 0 : index
    %c0_24 = arith.constant 0 : index
    %34 = vector.load %arg5[%c2_22, %c0_23, %c0_24] : memref<3x8x128xf32, #tpu.memory_space<vmem>>, vector<1x8x128xf32>
    %35 = vector.shape_cast %34 : vector<1x8x128xf32> to vector<8x128xf32>
    %36 = vector.shape_cast %33 : vector<8x128xf32> to vector<1x8x128xf32>
    tpu.vector_store %arg5[%c2_22, %c0_23, %c0_24], %36 {strides = array<i32>} : memref<3x8x128xf32, #tpu.memory_space<vmem>>, vector<1x8x128xf32>,
    %c0_i32_25 = arith.constant 0 : i32
    %37 = arith.cmpi eq, %arg1, %c0_i32_25 : i32
    %38 = arith.extui %37 : i1 to i32
    %c0_i32_26 = arith.constant 0 : i32
    %39 = arith.cmpi ne, %38, %c0_i32_26 : i32
    scf.if %39 {
      %c0_27 = arith.constant 0 : index
      %c0_28 = arith.constant 0 : index
      %c0_29 = arith.constant 0 : index
      %40 = vector.load %arg5[%c0_27, %c0_28, %c0_29] : memref<3x8x128xf32, #tpu.memory_space<vmem>>, vector<1x8x128xf32>
      %41 = vector.shape_cast %40 : vector<1x8x128xf32> to vector<8x128xf32>
      %42 = vector.shape_cast %41 : vector<8x128xf32> to vector<1x8x128xf32>
      %cst_30 = arith.constant dense<0.000000e+00> : vector<1xf32>
      %43 = vector.multi_reduction <add>, %42, %cst_30 [1, 2] : vector<1x8x128xf32> to vector<1xf32>
      %44 = vector.shape_cast %43 : vector<1xf32> to vector<1x1x1xf32>
      %45 = vector.extract %44[0, 0, 0] : f32 from vector<1x1x1xf32>
      %c1_31 = arith.constant 1 : index
      %c0_32 = arith.constant 0 : index
      %c0_33 = arith.constant 0 : index
      %46 = vector.load %arg5[%c1_31, %c0_32, %c0_33] : memref<3x8x128xf32, #tpu.memory_space<vmem>>, vector<1x8x128xf32>
      %47 = vector.shape_cast %46 : vector<1x8x128xf32> to vector<8x128xf32>
      %48 = vector.shape_cast %47 : vector<8x128xf32> to vector<1x8x128xf32>
      %cst_34 = arith.constant dense<0.000000e+00> : vector<1xf32>
      %49 = vector.multi_reduction <add>, %48, %cst_34 [1, 2] : vector<1x8x128xf32> to vector<1xf32>
      %50 = vector.shape_cast %49 : vector<1xf32> to vector<1x1x1xf32>
      %51 = vector.extract %50[0, 0, 0] : f32 from vector<1x1x1xf32>
      %c2_35 = arith.constant 2 : index
      %c0_36 = arith.constant 0 : index
      %c0_37 = arith.constant 0 : index
      %52 = vector.load %arg5[%c2_35, %c0_36, %c0_37] : memref<3x8x128xf32, #tpu.memory_space<vmem>>, vector<1x8x128xf32>
      %53 = vector.shape_cast %52 : vector<1x8x128xf32> to vector<8x128xf32>
      %54 = vector.shape_cast %53 : vector<8x128xf32> to vector<1x8x128xf32>
      %cst_38 = arith.constant dense<0.000000e+00> : vector<1xf32>
      %55 = vector.multi_reduction <add>, %54, %cst_38 [1, 2] : vector<1x8x128xf32> to vector<1xf32>
      %56 = vector.shape_cast %55 : vector<1xf32> to vector<1x1x1xf32>
      %57 = vector.extract %56[0, 0, 0] : f32 from vector<1x1x1xf32>
      %58 = arith.subf %51, %45 : f32
      %59 = arith.subf %57, %45 : f32
      %cst_39 = arith.constant 1.000000e+00 : f32
      %60 = arith.addf %45, %cst_39 : f32
      %cst_40 = arith.constant 0.699999988 : f32
      %61 = arith.mulf %cst_40, %58 : f32
      %62 = arith.addf %45, %61 : f32
      %cst_41 = arith.constant 3.000000e-01 : f32
      %63 = arith.mulf %cst_41, %59 : f32
      %64 = arith.addf %62, %63 : f32
      %cst_42 = arith.constant 1.000000e+00 : f32
      %65 = arith.addf %64, %cst_42 : f32
      %66 = arith.divf %60, %65 : f32
      %cst_43 = arith.constant 1.000000e+00 : f32
      %67 = arith.subf %cst_43, %66 : f32
      %cst_44 = arith.constant 0.000000e+00 : f32
      %68 = vector.broadcast %cst_44 : f32 to vector<1x1x128xf32>
      %69 = vector.broadcast %67 : f32 to vector<1x1x128xf32>
      %70 = arith.addf %69, %68 : vector<1x1x128xf32>
      %c0_45 = arith.constant 0 : index
      %c0_46 = arith.constant 0 : index
      %c0_47 = arith.constant 0 : index
      %71 = vector.load %arg4[%c0_45, %c0_46, %c0_47] : memref<1x1x128xf32, #tpu.memory_space<vmem>>, vector<1x1x128xf32>
      tpu.vector_store %arg4[%c0_45, %c0_46, %c0_47], %70 {strides = array<i32>} : memref<1x1x128xf32, #tpu.memory_space<vmem>>, vector<1x1x128xf32>,
    } else {
    }
    return
  }
  func.func @transform_0(%arg0: i32, %arg1: i32) -> (i32, i32, i32) {
    %c0_i32 = arith.constant 0 : i32
    %c0_i32_0 = arith.constant 0 : i32
    return %arg0, %arg1, %c0_i32 : i32, i32, i32
  }
  func.func @transform_1(%arg0: i32, %arg1: i32) -> (i32, i32, i32) {
    %c0_i32 = arith.constant 0 : i32
    %c0_i32_0 = arith.constant 0 : i32
    return %arg0, %arg1, %c0_i32 : i32, i32, i32
  }
  func.func @transform_2(%arg0: i32, %arg1: i32) -> (i32, i32, i32) {
    %c0_i32 = arith.constant 0 : i32
    %c0_i32_0 = arith.constant 0 : i32
    %c0_i32_1 = arith.constant 0 : i32
    return %arg0, %c0_i32, %c0_i32_0 : i32, i32, i32
  }
}

</mosaic_0001>

<llo_original>
// kernel: tpu_custom_call.1
$region0: #{tpu_custom_call.1}
  #allocation0 [shape = 'u32[]', space=smem, size = 0x4, offset = 0x4, fixed_abs, tag = 'smem constant byte address 0x4 - core index']
  #allocation1 [shape = 'u32[144,128]{1,0:T(1,128)}', space=vmem, size = 0x12000, scoped, tag = 'internal scratch']
  #allocation2 [shape = 'f32[3,8,128]{2,1,0:T(8,128)}', space=vmem, size = 0x3000, scoped, tag = 'scratch operand']
  %s0 = inlined_call_operand.hbm [shape: f32[2,8,128], index: 0, kind: input, shape index: {}]
  %s1 = inlined_call_operand.hbm [shape: f32[2,8,128], index: 1, kind: input, shape index: {}]
  %s2 = inlined_call_operand.hbm [shape: f32[2,1,128], index: 2, kind: output, shape index: {}]
  %s3 = sld [smem:[#allocation0]]
  $region57: #{tpu_custom_call.1} parent=0
    _
  %s5 = ssub.s32 1, %s3
  %s6 = scalar_select 0, %s5, %s3
  $region1: #{tpu_custom_call.1} parent=0
    #allocation3 [shape = 'u8[8192]{0}', space=vmem, size = 0x2000, scoped, tag = 'input window, operand 0']
    #allocation4 [shape = 's32[2]{0}', space=sflag, size = 0x8, scoped, tag = 'scoped memory for tpu_custom_call.1']
    #allocation5 [shape = 's32[2]{0}', space=sflag, size = 0x8, scoped, tag = 'scoped memory for tpu_custom_call.1']
    #allocation6 [shape = 'u8[8192]{0}', space=vmem, size = 0x2000, scoped, tag = 'input window, operand 1']
    #allocation7 [shape = 's32[2]{0}', space=sflag, size = 0x8, scoped, tag = 'scoped memory for tpu_custom_call.1']
    #allocation8 [shape = 'u8[1024]{0}', space=vmem, size = 0x400, scoped, tag = 'output window, operand 0']
    %7 = vsyncpa [#allocation4], 0
    %s8 = scalar_lea.sflag [#allocation4], 1
    %9 = vsyncpa %s8, 0
    %10 = vsyncpa [#allocation7], 0
    %s11 = scalar_lea.sflag [#allocation7], 1
    %12 = vsyncpa %s11, 0
    %13 = vsyncpa [#allocation5], 0
    %s14 = scalar_lea.sflag [#allocation5], 1
    %15 = vsyncpa %s14, 0
    loop: start=0, step=1, limit=4
    $region2: #{tpu_custom_call.1} parent=1 // loop_pre_header
      _
    $region3: #{tpu_custom_call.1} parent=1 // loop_header
      %s17 = sphi 0, %s21
      %p18 = scmp.ge.s32.totalorder %s17, 4
      %s24 = sphi 0, %s36
      %s25 = sphi 0, %s32
      %s26 = sphi 0, %s24
      %s27 = sphi 0, %s25
      %s28 = sphi 0, %s26
      %s29 = sphi 0, %s27
      %s41 = sphi 0, %s43
      %s44 = sphi 0, %s41
      %s45 = sphi 0, %s44
      %s61 = sphi 0, %s45
      %s69 = sphi 0, %s71
      %s72 = sphi 0, %s69
      %s73 = sphi 0, %s72
      %s89 = sphi 0, %s73
      %s95 = sphi 0, %s97
      %s98 = sphi 0, %s95
      %s99 = sphi 0, %s98
      %s115 = sphi 0, %s99
    $region4: #{tpu_custom_call.1} parent=1 // loop_header_branch
      %20 = sbr.rel (%p18) target = $region8
    $region5: #{tpu_custom_call.1} parent=1 // loop_body
      %s22 = ssub.s32 %s17, 1
      %s23 = ssub.s32 %s17, 2
      %s30 = sadd.s32 1, %s25
      %p31 = scmp.ge.s32.totalorder %s30, 1
      %s32 = scalar_select %p31, 0, %s30
      %s33 = sadd.s32 1, %s24
      %s34 = scalar_select %p31, %s33, %s24
      %p35 = scmp.ge.s32.totalorder %s34, 2
      %s36 = scalar_select %p35, 0, %s34
      %s37 = ssub.s32 %s24, %s36
      %s38 = ssub.s32 %s25, %s32
      %s39 = sor.u32 %s37, %s38
      %p40 = scmp.eq.s32.totalorder %s39, 0
      %s42 = sadd.s32 %s41, 1
      %s43 = scalar_select %p40, %s41, %s42
      %p46 = pneg %p40
      %p47 = scmp.eq.s32.totalorder %s17, 1
      %p48 = por %p46, %p47
      %p49 = scmp.ne.s32.totalorder %s41, %s44
      %p50 = scmp.eq.s32.totalorder %s17, 0
      %p51 = por %p49, %p50
      %p52 = scmp.ne.s32.totalorder %s41, %s44
      %p53 = scmp.eq.s32.totalorder %s22, 1
      %p54 = por %p52, %p53
      %p55 = scmp.ne.s32.totalorder %s44, %s45
      %p56 = scmp.eq.s32.totalorder %s22, 0
      %p57 = por %p55, %p56
      %p58 = scmp.ne.s32.totalorder %s44, %s45
      %p59 = scmp.eq.s32.totalorder %s23, 1
      %p60 = por %p58, %p59
      %p62 = scmp.ne.s32.totalorder %s45, %s61
      %p63 = scmp.eq.s32.totalorder %s23, 0
      %p64 = por %p62, %p63
      %s65 = ssub.s32 %s24, %s36
      %s66 = ssub.s32 %s25, %s32
      %s67 = sor.u32 %s65, %s66
      %p68 = scmp.eq.s32.totalorder %s67, 0
      %s70 = sadd.s32 %s69, 1
      %s71 = scalar_select %p68, %s69, %s70
      %p74 = pneg %p68
      %p75 = scmp.eq.s32.totalorder %s17, 1
      %p76 = por %p74, %p75
      %p77 = scmp.ne.s32.totalorder %s69, %s72
      %p78 = scmp.eq.s32.totalorder %s17, 0
      %p79 = por %p77, %p78
      %p80 = scmp.ne.s32.totalorder %s69, %s72
      %p81 = scmp.eq.s32.totalorder %s22, 1
      %p82 = por %p80, %p81
      %p83 = scmp.ne.s32.totalorder %s72, %s73
      %p84 = scmp.eq.s32.totalorder %s22, 0
      %p85 = por %p83, %p84
      %p86 = scmp.ne.s32.totalorder %s72, %s73
      %p87 = scmp.eq.s32.totalorder %s23, 1
      %p88 = por %p86, %p87
      %p90 = scmp.ne.s32.totalorder %s73, %s89
      %p91 = scmp.eq.s32.totalorder %s23, 0
      %p92 = por %p90, %p91
      %s93 = ssub.s32 %s24, %s36
      %p94 = scmp.eq.s32.totalorder %s93, 0
      %s96 = sadd.s32 %s95, 1
      %s97 = scalar_select %p94, %s95, %s96
      %p100 = pneg %p94
      %p101 = scmp.eq.s32.totalorder %s17, 1
      %p102 = por %p100, %p101
      %p103 = scmp.ne.s32.totalorder %s95, %s98
      %p104 = scmp.eq.s32.totalorder %s17, 0
      %p105 = por %p103, %p104
      %p106 = scmp.ne.s32.totalorder %s95, %s98
      %p107 = scmp.eq.s32.totalorder %s22, 1
      %p108 = por %p106, %p107
      %p109 = scmp.ne.s32.totalorder %s98, %s99
      %p110 = scmp.eq.s32.totalorder %s22, 0
      %p111 = por %p109, %p110
      %p112 = scmp.ne.s32.totalorder %s98, %s99
      %p113 = scmp.eq.s32.totalorder %s23, 1
      %p114 = por %p112, %p113
      %p116 = scmp.ne.s32.totalorder %s99, %s115
      %p117 = scmp.eq.s32.totalorder %s23, 0
      %p118 = por %p116, %p117
      %p119 = scmp.le.s32.totalorder 1, %s17
      %p120 = scmp.lt.s32.totalorder %s17, 3
      %p121 = pnand %p119, %p120
      %p122 = pneg %p121
      // Predicated region
      $region9: #{tpu_custom_call.1} parent=5 // pred_check
        _
      $region10: #{tpu_custom_call.1} parent=5 // pred_check_branch
        %124 = sbr.rel (%p121) target = $region12
      $region11: #{tpu_custom_call.1} parent=5 // pred_region
        %s125 = ssub.s32 %s17, 1
      $region12: #{tpu_custom_call.1} parent=5 // pred_fallthru
        _
      %p126 = scmp.lt.s32.totalorder %s17, 2
      // Predicated region
      $region13: #{tpu_custom_call.1} parent=5 // pred_check
        %p127 = pneg %p126
      $region14: #{tpu_custom_call.1} parent=5 // pred_check_branch
        %129 = sbr.rel (%p127) target = $region16
      $region15: #{tpu_custom_call.1} parent=5 // pred_region
        // Predicated region
        $region17: #{tpu_custom_call.1} parent=15 // pred_check
          %p130 = pneg %p51
        $region18: #{tpu_custom_call.1} parent=15 // pred_check_branch
          %132 = sbr.rel (%p130) target = $region20
        $region19: #{tpu_custom_call.1} parent=15 // pred_region
          %s133 = sand.u32 %s41, 1
          %s134 = scalar_lea.sflag [#allocation4], %s133
          %s135 = sand.u32 %s41, 1
          %s136 = smul.addr %s135, 8
          %s137 = scalar_lea.vmem [#allocation3], %s136
          %s139 = ssub.s32 128, 128
          %140 = vsyncadd %s134, %s139
          %s141 = sadd.s32 %s25, %s24
          %s142 = smul.addr %s141, 128
          %s143 = scalar_lea.hbm %s0, %s142
          %s145 = sshll.u32 %s137, 4
          %s146 = int_to_ptr.vmem [resolvable:$true] %s145
          %148 = dma.hbm_to_vmem [thread:$0]  %s143, 128, %s146, %s134
        $region20: #{tpu_custom_call.1} parent=15 // pred_fallthru
          _
        // Predicated region
        $region21: #{tpu_custom_call.1} parent=15 // pred_check
          %p149 = pneg %p79
        $region22: #{tpu_custom_call.1} parent=15 // pred_check_branch
          %151 = sbr.rel (%p149) target = $region24
        $region23: #{tpu_custom_call.1} parent=15 // pred_region
          %s152 = sand.u32 %s69, 1
          %s153 = scalar_lea.sflag [#allocation7], %s152
          %s154 = sand.u32 %s69, 1
          %s155 = smul.addr %s154, 8
          %s156 = scalar_lea.vmem [#allocation6], %s155
          %s158 = ssub.s32 128, 128
          %159 = vsyncadd %s153, %s158
          %s160 = sadd.s32 %s25, %s24
          %s161 = smul.addr %s160, 128
          %s162 = scalar_lea.hbm %s1, %s161
          %s164 = sshll.u32 %s156, 4
          %s165 = int_to_ptr.vmem [resolvable:$true] %s164
          %167 = dma.hbm_to_vmem [thread:$0]  %s162, 128, %s165, %s153
        $region24: #{tpu_custom_call.1} parent=15 // pred_fallthru
          _
      $region16: #{tpu_custom_call.1} parent=5 // pred_fallthru
        _
      %p168 = scmp.le.s32.totalorder 1, %s17
      %p169 = scmp.lt.s32.totalorder %s17, 3
      %p170 = pnand %p168, %p169
      %p171 = pneg %p170
      // Predicated region
      $region25: #{tpu_custom_call.1} parent=5 // pred_check
        _
      $region26: #{tpu_custom_call.1} parent=5 // pred_check_branch
        %173 = sbr.rel (%p170) target = $region28
      $region27: #{tpu_custom_call.1} parent=5 // pred_region
        %s174 = ssub.s32 %s17, 1
        %s175 = sand.u32 %s44, 1
        %s176 = scalar_lea.sflag [#allocation4], %s175
        %s177 = sand.u32 %s44, 1
        %s178 = smul.addr %s177, 8
        %s179 = scalar_lea.vmem [#allocation3], %s178
        // Predicated region
        $region29: #{tpu_custom_call.1} parent=27 // pred_check
          %p180 = pneg %p57
        $region30: #{tpu_custom_call.1} parent=27 // pred_check_branch
          %182 = sbr.rel (%p180) target = $region32
        $region31: #{tpu_custom_call.1} parent=27 // pred_region
          %183 = dma.done %s176, 128
        $region32: #{tpu_custom_call.1} parent=27 // pred_fallthru
          _
        %s184 = sand.u32 %s72, 1
        %s185 = scalar_lea.sflag [#allocation7], %s184
        %s186 = sand.u32 %s72, 1
        %s187 = smul.addr %s186, 8
        %s188 = scalar_lea.vmem [#allocation6], %s187
        // Predicated region
        $region33: #{tpu_custom_call.1} parent=27 // pred_check
          %p189 = pneg %p85
        $region34: #{tpu_custom_call.1} parent=27 // pred_check_branch
          %191 = sbr.rel (%p189) target = $region36
        $region35: #{tpu_custom_call.1} parent=27 // pred_region
          %192 = dma.done %s185, 128
        $region36: #{tpu_custom_call.1} parent=27 // pred_fallthru
          _
        %s193 = sand.u32 %s44, 1
        %s194 = scalar_lea.sflag [#allocation4], %s193
        %s195 = sand.u32 %s44, 1
        %s196 = smul.addr %s195, 8
        %s197 = scalar_lea.vmem [#allocation3], %s196
        %p198 = pneg %p57
        %p199 = pneg %p54
        %s200 = sand.u32 %s72, 1
        %s201 = scalar_lea.sflag [#allocation7], %s200
        %s202 = sand.u32 %s72, 1
        %s203 = smul.addr %s202, 8
        %s204 = scalar_lea.vmem [#allocation6], %s203
        %p205 = pneg %p85
        %p206 = pneg %p82
        %p207 = pneg %p111
        %p208 = pneg %p108
        %s209 = sand.u32 %s98, 1
        %s210 = scalar_lea.sflag [#allocation5], %s209
        %s211 = sand.u32 %s98, 1
        %s212 = scalar_lea.vmem [#allocation8], %s211
        %p213 = scmp.eq.s32.totalorder %s27, 0
        // Predicated region
        $region37: #{tpu_custom_call.1} parent=27 // pred_check
          %p214 = pneg %p213
        $region38: #{tpu_custom_call.1} parent=27 // pred_check_branch
          %216 = sbr.rel (%p214) target = $region40
        $region39: #{tpu_custom_call.1} parent=27 // pred_region
          %217 = vst [vmem:[#allocation2] sm:$0xff] 0.0
          %218 = vst [vmem:[#allocation2 + $0x8] sm:$0xff] 0.0
          %219 = vst [vmem:[#allocation2 + $0x10] sm:$0xff] 0.0
        $region40: #{tpu_custom_call.1} parent=27 // pred_fallthru
          _
        %v220 = vld [vmem:[%s179] sm:$0xff]
        %v221 = vld [vmem:[%s188] sm:$0xff]
        %v222 = vxor.u32 %v220, 2147483648
        %v223 = vmul.f32 %v222, 1.442695
        %v224 = vpow.pop %v223
        %v225 = vadd.f32 %v224, 1.0
        %v226 = vrcp.pop %v225
        %v227 = vmul.f32 1.0, %v226
        %v228 = vld [vmem:[#allocation2] sm:$0xff]
        %v229 = vmul.f32 %v227, %v221
        %v230 = vadd.f32 %v229, 0.0
        %v231 = vadd.f32 %v228, %v230
        %232 = vst [vmem:[#allocation2] sm:$0xff] %v231
        %s233 = scalar_lea.vmem [#allocation2], 8
        %v234 = vld [vmem:[%s233] sm:$0xff]
        %v235 = vadd.f32 %v227, 0.0
        %v236 = vadd.f32 %v234, %v235
        %237 = vst [vmem:[%s233] sm:$0xff] %v236
        %s238 = scalar_lea.vmem [#allocation2], 16
        %v239 = vld [vmem:[%s238] sm:$0xff]
        %v240 = vadd.f32 %v221, 0.0
        %v241 = vadd.f32 %v239, %v240
        %242 = vst [vmem:[%s238] sm:$0xff] %v241
        // Predicated region
        $region41: #{tpu_custom_call.1} parent=27 // pred_check
          %p243 = pneg %p213
        $region42: #{tpu_custom_call.1} parent=27 // pred_check_branch
          %245 = sbr.rel (%p243) target = $region44
        $region43: #{tpu_custom_call.1} parent=27 // pred_region
          %v246 = vld [vmem:[#allocation2] sm:$0xff]
          %247 = vadd.xlane.f32.xlu0 %v246
          %v248 = vpop.xlane.xlu0 %247
          %v249 = vrot.slane %v248, 4
          %v250 = vadd.f32 %v248, %v249
          %v251 = vrot.slane %v250, 2
          %v252 = vadd.f32 %v250, %v251
          %v253 = vrot.slane %v252, 1
          %v254 = vadd.f32 %v252, %v253
          %s255 = vtos %v254
          %v256 = vld [vmem:[%s233] sm:$0xff]
          %257 = vadd.xlane.f32.xlu0 %v256
          %v258 = vpop.xlane.xlu0 %257
          %v259 = vrot.slane %v258, 4
          %v260 = vadd.f32 %v258, %v259
          %v261 = vrot.slane %v260, 2
          %v262 = vadd.f32 %v260, %v261
          %v263 = vrot.slane %v262, 1
          %v264 = vadd.f32 %v262, %v263
          %s265 = vtos %v264
          %v266 = vld [vmem:[%s238] sm:$0xff]
          %267 = vadd.xlane.f32.xlu0 %v266
          %v268 = vpop.xlane.xlu0 %267
          %v269 = vrot.slane %v268, 4
          %v270 = vadd.f32 %v268, %v269
          %v271 = vrot.slane %v270, 2
          %v272 = vadd.f32 %v270, %v271
          %v273 = vrot.slane %v272, 1
          %v274 = vadd.f32 %v272, %v273
          %s275 = vtos %v274
          %s276 = ssub.f32 %s265, %s255
          %s277 = ssub.f32 %s275, %s255
          %s278 = sadd.f32 %s255, 1.0
          %s279 = smul.f32 %s276, 0.7
          %s280 = sadd.f32 %s255, %s279
          %s281 = smul.f32 %s277, 0.3
          %s282 = sadd.f32 %s280, %s281
          %s283 = sadd.f32 %s282, 1.0
          %v284 = vstv %s283
          %v285 = vrcp.pop %v284
          %s286 = vtos %v285
          %s287 = smul.f32 %s278, %s286
          %s288 = ssub.f32 1.0, %s287
          %v289 = vstv %s288
          %v290 = vadd.f32 %v289, 0.0
          %291 = vst [vmem:[%s212] sm:$0x1] %v290
        $region44: #{tpu_custom_call.1} parent=27 // pred_fallthru
          _
        %s292 = sand.u32 %s98, 1
        %s293 = scalar_lea.sflag [#allocation5], %s292
        %s294 = sand.u32 %s98, 1
        %s295 = scalar_lea.vmem [#allocation8], %s294
        // Predicated region
        $region45: #{tpu_custom_call.1} parent=27 // pred_check
          %p296 = pneg %p108
        $region46: #{tpu_custom_call.1} parent=27 // pred_check_branch
          %298 = sbr.rel (%p296) target = $region48
        $region47: #{tpu_custom_call.1} parent=27 // pred_region
          %s300 = ssub.s32 16, 16
          %301 = vsyncadd %s293, %s300
          %s302 = smul.addr %s26, 16
          %s303 = scalar_lea.hbm %s2, %s302
          %s305 = sshll.u32 %s295, 4
          %s306 = int_to_ptr.vmem [resolvable:$true] %s305
          %308 = dma.vmem_to_hbm [thread:$0]  %s306, 16, %s303, %s293
        $region48: #{tpu_custom_call.1} parent=27 // pred_fallthru
          _
      $region28: #{tpu_custom_call.1} parent=5 // pred_fallthru
        _
      %p309 = scmp.le.s32.totalorder 2, %s17
      // Predicated region
      $region49: #{tpu_custom_call.1} parent=5 // pred_check
        %p310 = pneg %p309
      $region50: #{tpu_custom_call.1} parent=5 // pred_check_branch
        %312 = sbr.rel (%p310) target = $region52
      $region51: #{tpu_custom_call.1} parent=5 // pred_region
        %s313 = ssub.s32 %s17, 2
        // Predicated region
        $region53: #{tpu_custom_call.1} parent=51 // pred_check
          %p314 = pneg %p114
        $region54: #{tpu_custom_call.1} parent=51 // pred_check_branch
          %316 = sbr.rel (%p314) target = $region56
        $region55: #{tpu_custom_call.1} parent=51 // pred_region
          %s317 = sand.u32 %s99, 1
          %s318 = scalar_lea.sflag [#allocation5], %s317
          %s319 = sand.u32 %s99, 1
          %s320 = scalar_lea.vmem [#allocation8], %s319
          %321 = dma.done %s318, 16
        $region56: #{tpu_custom_call.1} parent=51 // pred_fallthru
          _
      $region52: #{tpu_custom_call.1} parent=5 // pred_fallthru
        _
    $region6: #{tpu_custom_call.1} parent=1 // loop_footer
      %s21 = sadd.s32 1, %s17
    $region7: #{tpu_custom_call.1} parent=1 // loop_footer_branch
      %16 = sbr.rel target = $region3
    $region8: #{tpu_custom_call.1} parent=1 // loop_exit
      _
    %322 = vsyncpa [#allocation4], 1
    %s323 = scalar_lea.sflag [#allocation4], 1
    %324 = vsyncpa %s323, 1
    %325 = vsyncpa [#allocation7], 1
    %s326 = scalar_lea.sflag [#allocation7], 1
    %327 = vsyncpa %s326, 1
    %328 = vsyncpa [#allocation5], 1
    %s329 = scalar_lea.sflag [#allocation5], 1
    %330 = vsyncpa %s329, 1

</llo_original>
